<compile_context>
chip_gen: v7x
topology: tpu7x:2x2x1
jax: 0.10.0
libtpu: 0.0.40
codegen_flags: <defaults>
</compile_context>

<pallas_src>
import jax
import jax.numpy as jnp
from jax.experimental import pallas as pl
from jax.experimental.pallas import tpu as pltpu

_LANE = 128
_SCALE = 2.0 * 3.141592653589793 / 360.0      # degrees -> radians
_TWO_OVER_PI = 0.6366197723675814
_PI2_HI = 1.5707963705062866                  # float32(pi/2)
_PI2_LO = -4.371139000186243e-08              # pi/2 - float32(pi/2)


def _sincos_kernel(lon_ref, sin_ref, cos_ref):
    # lon_ref: (block_rows, 128) f32 tile; sin_ref/cos_ref: same-shape outputs.
    ang = lon_ref[...] * _SCALE                           # VPU

    # Shared single-step Cody-Waite range reduction: r in [-pi/4, pi/4].
    kf = jnp.floor(ang * _TWO_OVER_PI + 0.5)
    r = (ang - kf * _PI2_HI) - kf * _PI2_LO
    z = r * r

    # cephes sinf/cosf minimax polynomials (shared z).
    s = ((-1.9515295891e-4 * z + 8.3321608736e-3) * z - 1.6666654611e-1) * z * r + r
    c = (((2.443315711809948e-5 * z - 1.388731625493765e-3) * z
          + 4.166664568298827e-2) * z * z - 0.5 * z + 1.0)

    # Quadrant selection (q = round(ang / (pi/2)) mod 4).
    q = kf.astype(jnp.int32) & 3
    swap = (q & 1) == 1
    sin_v = jnp.where(swap, c, s)
    cos_v = jnp.where(swap, s, c)
    sin_v = jnp.where(q >= 2, -sin_v, sin_v)
    cos_v = jnp.where((q == 1) | (q == 2), -cos_v, cos_v)

    sin_ref[...] = sin_v.astype(sin_ref.dtype)
    cos_ref[...] = cos_v.astype(cos_ref.dtype)


def sincos_slabs(lon: jax.Array, *, block_rows: int = 2048,
                 out_dtype=jnp.float32):
    """lon: (N,) -> (sin2d, cos2d), each a dense (ceil(N/128), 128) slab.

    Zero layout glue: consumers that can read planar slabs should use this
    directly (and take lat from the original array).  out_dtype=bf16 halves
    write traffic if downstream tolerates it (semantics change; default f32).
    """
    n = lon.shape[0]
    rows = pl.cdiv(n, _LANE)

    lon_f = lon.astype(jnp.float32)
    pad = rows * _LANE - n
    if pad:  # only the unavoidable 128-alignment pad; zero-copy when aligned
        lon_f = jnp.pad(lon_f, (0, pad))
    lon2d = lon_f.reshape(rows, _LANE)

    # >= ~4 grid steps when possible (megacore sharding on v7x), rows a
    # multiple of 8 unless the block is full-extent (tiny inputs).
    req = max(8, min(block_rows, pl.cdiv(rows, 4)))
    req = ((req + 7) // 8) * 8
    br = min(req, rows)
    grid = (pl.cdiv(rows, br),)

    sin2d, cos2d = pl.pallas_call(
        _sincos_kernel,
        out_shape=(jax.ShapeDtypeStruct((rows, _LANE), out_dtype),
                   jax.ShapeDtypeStruct((rows, _LANE), out_dtype)),
        grid=grid,
        in_specs=[pl.BlockSpec((br, _LANE), lambda i: (i, 0))],
        out_specs=(pl.BlockSpec((br, _LANE), lambda i: (i, 0)),
                   pl.BlockSpec((br, _LANE), lambda i: (i, 0))),
        compiler_params=pltpu.CompilerParams(
            dimension_semantics=("parallel",),
        ),
    )(lon2d)
    return sin2d, cos2d


def sincos_encoding(lat: jax.Array, lon: jax.Array, *,
                    block_rows: int = 2048) -> jax.Array:
    """lat, lon: (N,) -> (N, 3) f32 with columns [lat, sin(lon'), cos(lon')]."""
    assert lat.shape == lon.shape and lat.ndim == 1
    n = lat.shape[0]
    sin2d, cos2d = sincos_slabs(lon, block_rows=block_rows)
    lon_sin = sin2d.reshape(-1)[:n]
    lon_cos = cos2d.reshape(-1)[:n]
    # Single fused XLA pass reproducing np.stack((lat, sin, cos), axis=1);
    # lat is taken straight from the input (never streamed through the kernel).
    return jnp.stack((lat.astype(jnp.float32), lon_sin, lon_cos), axis=1)


def _reference(lat, lon):
    lon_sin = jnp.sin(2.0 * jnp.pi * lon / 360.0)
    lon_cos = jnp.cos(2.0 * jnp.pi * lon / 360.0)
    return jnp.stack((lat.astype(jnp.float32), lon_sin, lon_cos), axis=1)


if __name__ == "__main__":
    key = jax.random.PRNGKey(0)
    k1, k2 = jax.random.split(key)

    # N=200: padded, single tiny block.  N=2500: ragged last block, multi-step
    # grid.  N=4096: 128-aligned (zero-copy input), 4-step grid.
    for n in (200, 2500, 4096):
        lat = jax.random.uniform(k1, (n,), jnp.float32, minval=-90.0, maxval=90.0)
        lon = jax.random.uniform(k2, (n,), jnp.float32, minval=-180.0, maxval=540.0)

        out = jax.block_until_ready(sincos_encoding(lat, lon))
        ref = _reference(lat, lon)

        assert out.shape == (n, 3), out.shape
        assert jnp.allclose(out, ref, atol=1e-5, rtol=1e-5), (
            f"mismatch at N={n}: max abs err {jnp.max(jnp.abs(out - ref))}")

    print("KERNEL_OK")
</pallas_src>

<mosaic_0001>
module attributes {stable_mosaic.version = 11 : i64} {
  func.func @_sincos_kernel(%arg0: i32, %arg1: memref<2x128xf32, #tpu.memory_space<vmem>>, %arg2: memref<2x128xf32, #tpu.memory_space<vmem>>, %arg3: memref<2x128xf32, #tpu.memory_space<vmem>>) attributes {dimension_semantics = [#tpu.dimension_semantics<parallel>], iteration_bounds = array<i64: 1>, scalar_prefetch = 0 : i64, scratch_operands = 0 : i64, tpu.core_type = #tpu.core_type<tc>, window_params = [{transform_indices = @transform_0, window_bounds = array<i64: 2, 128>}, {transform_indices = @transform_1, window_bounds = array<i64: 2, 128>}, {transform_indices = @transform_2, window_bounds = array<i64: 2, 128>}]} {
    %c0 = arith.constant 0 : index
    %c0_0 = arith.constant 0 : index
    %0 = vector.load %arg1[%c0, %c0_0] : memref<2x128xf32, #tpu.memory_space<vmem>>, vector<2x128xf32>
    %cst = arith.constant 0.0174532924 : f32
    %1 = vector.broadcast %cst : f32 to vector<2x128xf32>
    %2 = arith.mulf %0, %1 : vector<2x128xf32>
    %cst_1 = arith.constant 0.636619746 : f32
    %3 = vector.broadcast %cst_1 : f32 to vector<2x128xf32>
    %4 = arith.mulf %2, %3 : vector<2x128xf32>
    %cst_2 = arith.constant 5.000000e-01 : f32
    %5 = vector.broadcast %cst_2 : f32 to vector<2x128xf32>
    %6 = arith.addf %4, %5 : vector<2x128xf32>
    %7 = math.floor %6 : vector<2x128xf32>
    %cst_3 = arith.constant 1.57079637 : f32
    %8 = vector.broadcast %cst_3 : f32 to vector<2x128xf32>
    %9 = arith.mulf %7, %8 : vector<2x128xf32>
    %10 = arith.subf %2, %9 : vector<2x128xf32>
    %cst_4 = arith.constant -4.37113883E-8 : f32
    %11 = vector.broadcast %cst_4 : f32 to vector<2x128xf32>
    %12 = arith.mulf %7, %11 : vector<2x128xf32>
    %13 = arith.subf %10, %12 : vector<2x128xf32>
    %14 = arith.mulf %13, %13 : vector<2x128xf32>
    %cst_5 = arith.constant -1.95152956E-4 : f32
    %15 = vector.broadcast %cst_5 : f32 to vector<2x128xf32>
    %16 = arith.mulf %15, %14 : vector<2x128xf32>
    %cst_6 = arith.constant 0.00833216123 : f32
    %17 = vector.broadcast %cst_6 : f32 to vector<2x128xf32>
    %18 = arith.addf %16, %17 : vector<2x128xf32>
    %19 = arith.mulf %18, %14 : vector<2x128xf32>
    %cst_7 = arith.constant 0.166666552 : f32
    %20 = vector.broadcast %cst_7 : f32 to vector<2x128xf32>
    %21 = arith.subf %19, %20 : vector<2x128xf32>
    %22 = arith.mulf %21, %14 : vector<2x128xf32>
    %23 = arith.mulf %22, %13 : vector<2x128xf32>
    %24 = arith.addf %23, %13 : vector<2x128xf32>
    %cst_8 = arith.constant 2.44331568E-5 : f32
    %25 = vector.broadcast %cst_8 : f32 to vector<2x128xf32>
    %26 = arith.mulf %25, %14 : vector<2x128xf32>
    %cst_9 = arith.constant 0.00138873165 : f32
    %27 = vector.broadcast %cst_9 : f32 to vector<2x128xf32>
    %28 = arith.subf %26, %27 : vector<2x128xf32>
    %29 = arith.mulf %28, %14 : vector<2x128xf32>
    %cst_10 = arith.constant 0.0416666456 : f32
    %30 = vector.broadcast %cst_10 : f32 to vector<2x128xf32>
    %31 = arith.addf %29, %30 : vector<2x128xf32>
    %32 = arith.mulf %31, %14 : vector<2x128xf32>
    %33 = arith.mulf %32, %14 : vector<2x128xf32>
    %cst_11 = arith.constant 5.000000e-01 : f32
    %34 = vector.broadcast %cst_11 : f32 to vector<2x128xf32>
    %35 = arith.mulf %34, %14 : vector<2x128xf32>
    %36 = arith.subf %33, %35 : vector<2x128xf32>
    %cst_12 = arith.constant 1.000000e+00 : f32
    %37 = vector.broadcast %cst_12 : f32 to vector<2x128xf32>
    %38 = arith.addf %36, %37 : vector<2x128xf32>
    %39 = arith.fptosi %7 : vector<2x128xf32> to vector<2x128xi32>
    %c3_i32 = arith.constant 3 : i32
    %40 = vector.broadcast %c3_i32 : i32 to vector<2x128xi32>
    %41 = arith.andi %39, %40 : vector<2x128xi32>
    %c1_i32 = arith.constant 1 : i32
    %42 = vector.broadcast %c1_i32 : i32 to vector<2x128xi32>
    %43 = arith.andi %41, %42 : vector<2x128xi32>
    %c1_i32_13 = arith.constant 1 : i32
    %44 = vector.broadcast %c1_i32_13 : i32 to vector<2x128xi32>
    %45 = arith.cmpi eq, %43, %44 : vector<2x128xi32>
    %46 = arith.select %45, %38, %24 : vector<2x128xi1>, vector<2x128xf32>
    %47 = arith.select %45, %24, %38 : vector<2x128xi1>, vector<2x128xf32>
    %c2_i32 = arith.constant 2 : i32
    %48 = vector.broadcast %c2_i32 : i32 to vector<2x128xi32>
    %49 = arith.cmpi sge, %41, %48 : vector<2x128xi32>
    %cst_14 = arith.constant 0.000000e+00 : f32
    %50 = vector.broadcast %cst_14 : f32 to vector<2x128xf32>
    %51 = arith.subf %50, %46 : vector<2x128xf32>
    %52 = arith.select %49, %51, %46 : vector<2x128xi1>, vector<2x128xf32>
    %c1_i32_15 = arith.constant 1 : i32
    %53 = vector.broadcast %c1_i32_15 : i32 to vector<2x128xi32>
    %54 = arith.cmpi eq, %41, %53 : vector<2x128xi32>
    %c2_i32_16 = arith.constant 2 : i32
    %55 = vector.broadcast %c2_i32_16 : i32 to vector<2x128xi32>
    %56 = arith.cmpi eq, %41, %55 : vector<2x128xi32>
    %57 = arith.ori %54, %56 : vector<2x128xi1>
    %cst_17 = arith.constant 0.000000e+00 : f32
    %58 = vector.broadcast %cst_17 : f32 to vector<2x128xf32>
    %59 = arith.subf %58, %47 : vector<2x128xf32>
    %60 = arith.select %57, %59, %47 : vector<2x128xi1>, vector<2x128xf32>
    %c0_18 = arith.constant 0 : index
    %c0_19 = arith.constant 0 : index
    %61 = vector.load %arg2[%c0_18, %c0_19] : memref<2x128xf32, #tpu.memory_space<vmem>>, vector<2x128xf32>
    tpu.vector_store %arg2[%c0_18, %c0_19], %52 {strides = array<i32>} : memref<2x128xf32, #tpu.memory_space<vmem>>, vector<2x128xf32>,
    %c0_20 = arith.constant 0 : index
    %c0_21 = arith.constant 0 : index
    %62 = vector.load %arg3[%c0_20, %c0_21] : memref<2x128xf32, #tpu.memory_space<vmem>>, vector<2x128xf32>
    tpu.vector_store %arg3[%c0_20, %c0_21], %60 {strides = array<i32>} : memref<2x128xf32, #tpu.memory_space<vmem>>, vector<2x128xf32>,
    return
  }
  func.func @transform_0(%arg0: i32) -> (i32, i32) {
    %c0_i32 = arith.constant 0 : i32
    %c0_i32_0 = arith.constant 0 : i32
    return %arg0, %c0_i32 : i32, i32
  }
  func.func @transform_1(%arg0: i32) -> (i32, i32) {
    %c0_i32 = arith.constant 0 : i32
    %c0_i32_0 = arith.constant 0 : i32
    return %arg0, %c0_i32 : i32, i32
  }
  func.func @transform_2(%arg0: i32) -> (i32, i32) {
    %c0_i32 = arith.constant 0 : i32
    %c0_i32_0 = arith.constant 0 : i32
    return %arg0, %c0_i32 : i32, i32
  }
}

</mosaic_0001>

<llo_original>
// kernel: tpu_custom_call.1
$region0: #{tpu_custom_call.1}
  #allocation0 [shape = 'u32[]', space=smem, size = 0x4, offset = 0x4, fixed_abs, tag = 'smem constant byte address 0x4 - core index']
  #allocation1 [shape = 'u32[144,128]{1,0:T(1,128)}', space=vmem, size = 0x12000, scoped, tag = 'internal scratch']
  %s0 = inlined_call_operand.hbm [shape: f32[2,128], index: 0, kind: input, shape index: {}]
  %s1 = inlined_call_operand.hbm [shape: f32[2,128], index: 1, kind: output, shape index: {0}]
  %s2 = inlined_call_operand.hbm [shape: f32[2,128], index: 2, kind: output, shape index: {1}]
  %3 = xla_tuple %s1, %s2
  %s4 = sld [smem:[#allocation0]]
  $region26: #{tpu_custom_call.1} parent=0
    _
  %s6 = ssub.s32 1, %s4
  %s7 = scalar_select 0, %s6, %s4
  $region1: #{tpu_custom_call.1} parent=0
    #allocation2 [shape = 'u8[1024]{0}', space=vmem, size = 0x400, scoped, tag = 'input window, operand 0, single buffered']
    #allocation3 [shape = 's32[1]{0}', space=sflag, size = 0x4, scoped, tag = 'scoped memory for tpu_custom_call.1']
    #allocation4 [shape = 's32[1]{0}', space=sflag, size = 0x4, scoped, tag = 'scoped memory for tpu_custom_call.1']
    #allocation5 [shape = 'u8[1024]{0}', space=vmem, size = 0x400, scoped, tag = 'output window, operand 0, single buffered']
    #allocation6 [shape = 'u8[1024]{0}', space=vmem, size = 0x400, scoped, tag = 'output window, operand 1, single buffered']
    #allocation7 [shape = 's32[1]{0}', space=sflag, size = 0x4, scoped, tag = 'scoped memory for tpu_custom_call.1']
    %8 = vsyncpa [#allocation3], 0
    %9 = vsyncpa [#allocation4], 0
    %10 = vsyncpa [#allocation7], 0
    // Predicated region
    $region2: #{tpu_custom_call.1} parent=1 // pred_check
      _
    $region3: #{tpu_custom_call.1} parent=1 // pred_check_branch
      %12 = sbr.rel (0) target = $region5
    $region4: #{tpu_custom_call.1} parent=1 // pred_region
      %s14 = ssub.s32 32, 32
      %15 = vsyncadd [#allocation3], %s14
      %s17 = sshll.u32 [#allocation2], 4
      %s18 = int_to_ptr.vmem [resolvable:$true] %s17
      %20 = dma.hbm_to_vmem [thread:$0]  %s0, 32, %s18, [#allocation3]
    $region5: #{tpu_custom_call.1} parent=1 // pred_fallthru
      _
    // Predicated region
    $region6: #{tpu_custom_call.1} parent=1 // pred_check
      _
    $region7: #{tpu_custom_call.1} parent=1 // pred_check_branch
      %22 = sbr.rel (0) target = $region9
    $region8: #{tpu_custom_call.1} parent=1 // pred_region
      %23 = dma.done [#allocation3], 32
    $region9: #{tpu_custom_call.1} parent=1 // pred_fallthru
      _
    %v24 = vld [vmem:[#allocation2] sm:$0x3]
    %v25 = vmul.f32 %v24, 0.017453292
    %v26 = vmul.f32 %v25, 0.63661975
    %v27 = vadd.f32 %v26, 0.5
    %v28 = vfloor.f32 %v27
    %v29 = vmul.f32 %v28, 1.5707964
    %v30 = vsub.f32 %v25, %v29
    %v31 = vmul.f32 %v28, -4.371139e-08
    %v32 = vsub.f32 %v30, %v31
    %v33 = vmul.f32 %v32, %v32
    %v34 = vmul.f32 %v33, -0.00019515296
    %v35 = vadd.f32 %v34, 0.008332161
    %v36 = vmul.f32 %v35, %v33
    %v37 = vsub.f32 %v36, 0.16666655
    %v38 = vmul.f32 %v37, %v33
    %v39 = vmul.f32 %v38, %v32
    %v40 = vadd.f32 %v39, %v32
    %v41 = vmul.f32 %v33, 2.4433157e-05
    %v42 = vsub.f32 %v41, 0.0013887316
    %v43 = vmul.f32 %v42, %v33
    %v44 = vadd.f32 %v43, 0.041666646
    %v45 = vmul.f32 %v44, %v33
    %v46 = vmul.f32 %v45, %v33
    %v47 = vmul.f32 %v33, 0.5
    %v48 = vsub.f32 %v46, %v47
    %v49 = vadd.f32 %v48, 1.0
    %v50 = vcvt.f32.s32.to.zero.pseudo %v28
    %v51 = vand.u32 %v50, 3
    %v52 = vand.u32 %v51, 1
    %vm53 = vcmp.eq.s32.totalorder %v52, 1
    %v54 = vsel %vm53, %v49, %v40
    %v55 = vsel %vm53, %v40, %v49
    %vm56 = vcmp.ge.s32.totalorder %v51, 2
    %v57 = vsub.f32 0.0, %v54
    %v58 = vsel %vm56, %v57, %v54
    %vm59 = vcmp.eq.s32.totalorder %v51, 1
    %vm60 = vcmp.eq.s32.totalorder %v51, 2
    %vm61 = vmor %vm59, %vm60
    %v62 = vsub.f32 0.0, %v55
    %v63 = vsel %vm61, %v62, %v55
    %64 = vst [vmem:[#allocation5] sm:$0x3] %v58
    %65 = vst [vmem:[#allocation6] sm:$0x3] %v63
    // Predicated region
    $region10: #{tpu_custom_call.1} parent=1 // pred_check
      _
    $region11: #{tpu_custom_call.1} parent=1 // pred_check_branch
      %67 = sbr.rel (0) target = $region13
    $region12: #{tpu_custom_call.1} parent=1 // pred_region
      %s69 = ssub.s32 32, 32
      %70 = vsyncadd [#allocation4], %s69
      %s72 = sshll.u32 [#allocation5], 4
      %s73 = int_to_ptr.vmem [resolvable:$true] %s72
      %75 = dma.vmem_to_hbm [thread:$0]  %s73, 32, %s1, [#allocation4]
    $region13: #{tpu_custom_call.1} parent=1 // pred_fallthru
      _
    // Predicated region
    $region14: #{tpu_custom_call.1} parent=1 // pred_check
      _
    $region15: #{tpu_custom_call.1} parent=1 // pred_check_branch
      %77 = sbr.rel (0) target = $region17
    $region16: #{tpu_custom_call.1} parent=1 // pred_region
      %s79 = ssub.s32 32, 32
      %80 = vsyncadd [#allocation7], %s79
      %s82 = sshll.u32 [#allocation6], 4
      %s83 = int_to_ptr.vmem [resolvable:$true] %s82
      %85 = dma.vmem_to_hbm [thread:$0]  %s83, 32, %s2, [#allocation7]
    $region17: #{tpu_custom_call.1} parent=1 // pred_fallthru
      _
    // Predicated region
    $region18: #{tpu_custom_call.1} parent=1 // pred_check
      _
    $region19: #{tpu_custom_call.1} parent=1 // pred_check_branch
      %87 = sbr.rel (0) target = $region21
    $region20: #{tpu_custom_call.1} parent=1 // pred_region
      %88 = dma.done [#allocation4], 32
    $region21: #{tpu_custom_call.1} parent=1 // pred_fallthru
      _
    // Predicated region
    $region22: #{tpu_custom_call.1} parent=1 // pred_check
      _
    $region23: #{tpu_custom_call.1} parent=1 // pred_check_branch
      %90 = sbr.rel (0) target = $region25
    $region24: #{tpu_custom_call.1} parent=1 // pred_region
      %91 = dma.done [#allocation7], 32
    $region25: #{tpu_custom_call.1} parent=1 // pred_fallthru
      _
    %92 = vsyncpa [#allocation3], 1
    %93 = vsyncpa [#allocation4], 1
    %94 = vsyncpa [#allocation7], 1

</llo_original>
